<compile_context>
chip_gen: v6e
topology: v6e:2x2x1
jax: 0.10.0
libtpu: 0.0.40
codegen_flags: <defaults>
</compile_context>

<pallas_src>
import functools

import jax
import jax.numpy as jnp
from jax.experimental import pallas as pl
from jax.experimental.pallas import tpu as pltpu


# ---------------------------------------------------------------------------
# Kernel
# ---------------------------------------------------------------------------
def _make_mlp_kernel(layer_meta, act_fun, compute_dtype):
    """Fused-MLP kernel over one lane-dense batch tile.

    layer_meta[i] = (mode, out_i, in_i, w_col, b_col); mode in:
      "outer":  w packed as [out, 1] column,   h = w * h + b          (VPU, K == 1)
      "matmul": w packed as [out, in] block,   h = W @ h + b          (MXU)
      "reduce": w packed as [in, 1] column,    h = sum(w * h, 0) + b  (VPU + sublane reduce)

    Refs: x_ref [d_in, tile_n], p_ref [Rp, Cp] (all params, single DMA),
    out_ref [d_out, tile_n].  Batch sits on the 128-lane axis.
    """
    if act_fun == 0:
        act = jnp.tanh
    elif act_fun == 1:
        act = jax.nn.sigmoid
    elif act_fun == 2:
        act = lambda v: jnp.maximum(v, 0.0)
    else:
        raise ValueError("act_fun must be 0 (tanh), 1 (sigmoid) or 2 (relu)")

    n_layers = len(layer_meta)

    def kernel(x_ref, p_ref, out_ref):
        h = x_ref[...]                                       # [d_in, tile_n] f32
        for li, (mode, out_i, in_i, wc, bc) in enumerate(layer_meta):
            b = p_ref[0:out_i, bc:bc + 1]                    # [out, 1]
            if mode == "outer":
                w = p_ref[0:out_i, wc:wc + 1]                # [out, 1]
                h = w * h + b                                # VPU broadcast
            elif mode == "reduce":
                w = p_ref[0:in_i, wc:wc + 1]                 # [in, 1]
                h = jnp.sum(w * h, axis=0, keepdims=True) + b
            else:
                w = p_ref[0:out_i, wc:wc + in_i]             # [out, in]
                h = jnp.dot(w.astype(compute_dtype), h.astype(compute_dtype),
                            preferred_element_type=jnp.float32) + b
            if li < n_layers - 1:
                h = act(h.astype(compute_dtype))             # EUP (bf16 path if enabled)
        out_ref[...] = h.astype(out_ref.dtype)

    return kernel


# ---------------------------------------------------------------------------
# Parameter packing: all weights & biases -> one lane-aligned f32 block
# ---------------------------------------------------------------------------
_COL_ALIGN = 128   # each parameter starts on its own lane-tile boundary


def _pack_params(weights, biases):
    """Returns (packed [Rp, Cp] f32, layer_meta) for a single full-array DMA."""
    col = 0
    max_rows = 0
    pieces = []          # (array [rows, cols], col_start)
    layer_meta = []      # (mode, out_i, in_i, w_col, b_col)  -- all static
    for w, b in zip(weights, biases):
        w = jnp.asarray(w, jnp.float32)                      # PyTorch layout [out, in]
        b = jnp.asarray(b, jnp.float32).reshape(-1, 1)       # [out, 1]
        out_i, in_i = w.shape
        if in_i == 1:
            mode, wmat = "outer", w                          # keep [out, 1]
        elif out_i == 1:
            mode, wmat = "reduce", w.T                       # pre-transpose -> [in, 1]
        else:
            mode, wmat = "matmul", w                         # keep [out, in]
        w_col = col
        col += _COL_ALIGN * pl.cdiv(wmat.shape[1], _COL_ALIGN)
        b_col = col
        col += _COL_ALIGN
        pieces.append((wmat, w_col))
        pieces.append((b, b_col))
        layer_meta.append((mode, out_i, in_i, w_col, b_col))
        max_rows = max(max_rows, wmat.shape[0], out_i)

    rp = max(8, 8 * pl.cdiv(max_rows, 8))
    cp = _COL_ALIGN * pl.cdiv(col, _COL_ALIGN)
    packed = jnp.zeros((rp, cp), jnp.float32)
    for arr, c0 in pieces:
        packed = packed.at[0:arr.shape[0], c0:c0 + arr.shape[1]].set(arr)
    return packed, tuple(layer_meta)


def _max_lane_tile():
    # v5e has a single vector-store slot -> cap the lane tile there;
    # v6e / v7x can amortize step overhead with big 16K tiles.
    try:
        kind = jax.devices()[0].device_kind.lower()
    except Exception:
        kind = ""
    if "v5e" in kind or ("v5" in kind and "lite" in kind):
        return 4096
    return 16384


# ---------------------------------------------------------------------------
# Wrapper (fully jitted: transpose/pad/call/slice fuse into one dispatch)
# ---------------------------------------------------------------------------
@functools.partial(jax.jit, static_argnames=("act_fun", "tile_n", "use_bf16"))
def net_forward(x, weights, biases, act_fun=0, *, tile_n=None, use_bf16=False):
    """Fused MLP forward, identical semantics to the PyTorch `Net`.

    x: [N, D_in] f32; weights: PyTorch-layout W_i [out_i, in_i]; biases: b_i [out_i].
    Returns [N, D_out] f32.  `use_bf16=True` runs matmuls/activations in bf16
    (v6e/v7x EUP+MXU fast path); keep False on v5e / for strict f32 accuracy.
    """
    N, d_in = x.shape
    d_out = weights[-1].shape[0]

    # Lane-dense batch tiling: tile_n is always a multiple of 128; mid/large N
    # gets >= 2 "parallel" steps (v7x megacore); large N uses big tiles to
    # amortize the ~0.35 us per-grid-step overhead.
    if tile_n is None:
        n128 = 128 * pl.cdiv(N, 128)
        if n128 <= 512:
            tile_n = n128                                   # tiny batch: 1 step
        else:
            tile_n = min(_max_lane_tile(),
                         128 * pl.cdiv(pl.cdiv(N, 2), 128))  # >= 2 steps
    else:
        tile_n = 128 * pl.cdiv(tile_n, 128)
    n_pad = tile_n * pl.cdiv(N, tile_n)

    # Batch onto the lane axis; zero-pad to the tile multiple.
    xt = jnp.asarray(x, jnp.float32).T                       # [d_in, N]
    if n_pad != N:
        xt = jnp.pad(xt, ((0, 0), (0, n_pad - N)))

    packed, layer_meta = _pack_params(weights, biases)
    rp, cp = packed.shape

    compute_dtype = jnp.bfloat16 if use_bf16 else jnp.float32
    kernel = _make_mlp_kernel(layer_meta, act_fun, compute_dtype)

    flops = sum(2 * N * w.shape[0] * w.shape[1] for w in weights)
    trans = sum(N * w.shape[0] for w in weights[:-1]) if act_fun in (0, 1) else 0
    cost = pl.CostEstimate(
        flops=int(flops),
        transcendentals=int(trans),
        bytes_accessed=int(4 * (n_pad * (d_in + d_out) + rp * cp)),
    )

    fn = pl.pallas_call(
        kernel,
        out_shape=jax.ShapeDtypeStruct((d_out, n_pad), jnp.float32),
        grid_spec=pltpu.PrefetchScalarGridSpec(
            num_scalar_prefetch=0,
            grid=(n_pad // tile_n,),
            in_specs=[
                pl.BlockSpec((d_in, tile_n), lambda i: (0, i)),
                # All parameters: one full-array block, constant index_map
                # -> single DMA, stays VMEM-resident across grid steps.
                pl.BlockSpec((rp, cp), lambda i: (0, 0)),
            ],
            out_specs=pl.BlockSpec((d_out, tile_n), lambda i: (0, i)),
        ),
        compiler_params=pltpu.CompilerParams(
            dimension_semantics=("parallel",)),
        cost_estimate=cost,
    )
    out_t = fn(xt, packed)                                   # [d_out, n_pad] lane-dense
    return out_t[:, :N].T                                    # back to [N, d_out]


# ---------------------------------------------------------------------------
# Pure-JAX reference (for correctness check)
# ---------------------------------------------------------------------------
def net_forward_ref(x, weights, biases, act_fun=0):
    acts = {0: jnp.tanh, 1: jax.nn.sigmoid, 2: lambda v: jnp.maximum(v, 0.0)}
    act = acts[act_fun]
    h = x.astype(jnp.float32)
    for i, (w, b) in enumerate(zip(weights, biases)):
        h = h @ jnp.asarray(w, jnp.float32).T + jnp.asarray(b, jnp.float32)
        if i < len(weights) - 1:
            h = act(h)
    return h


# ---------------------------------------------------------------------------
# Main
# ---------------------------------------------------------------------------
if __name__ == "__main__":
    # Net([[1, 32, 32, 32, 1], 0])  ->  tanh MLP, scalar in, scalar out
    nn_layers = [1, 32, 32, 32, 1]
    act_fun = 0  # Tanh

    key = jax.random.PRNGKey(0)
    key, xk, xk2 = jax.random.split(key, 3)

    # Deterministic parameter init (PyTorch Linear shapes: W [out, in], b [out]).
    weights, biases = [], []
    for i in range(len(nn_layers) - 1):
        fan_in, fan_out = nn_layers[i], nn_layers[i + 1]
        key, wk, bk = jax.random.split(key, 3)
        bound = 1.0 / (fan_in ** 0.5)
        weights.append(jax.random.uniform(
            wk, (fan_out, fan_in), jnp.float32, -bound, bound))
        biases.append(jax.random.uniform(
            bk, (fan_out,), jnp.float32, -bound, bound))

    # --- Case 1: shipped N=256 collocation points, tanh, f32 ------------------
    N = 256
    x = jax.random.uniform(xk, (N, nn_layers[0]), jnp.float32, 0.0, 1.0)
    out = jax.block_until_ready(net_forward(x, weights, biases, act_fun=act_fun))
    ref = net_forward_ref(x, weights, biases, act_fun)
    assert out.shape == (N, nn_layers[-1])
    assert jnp.allclose(out, ref, atol=1e-5, rtol=1e-5), "mismatch vs reference (f32)"

    # --- Case 2: ragged N (padding) + multi-step parallel grid, ReLU ----------
    N2 = 1000
    x2 = jax.random.uniform(xk2, (N2, nn_layers[0]), jnp.float32, 0.0, 1.0)
    out2 = jax.block_until_ready(net_forward(x2, weights, biases, act_fun=2))
    ref2 = net_forward_ref(x2, weights, biases, 2)
    assert out2.shape == (N2, nn_layers[-1])
    assert jnp.allclose(out2, ref2, atol=1e-5, rtol=1e-5), "mismatch vs reference (relu)"

    # --- Case 3: bf16 fast path (v6e/v7x EUP/MXU), loose tolerance -------------
    out_bf16 = jax.block_until_ready(
        net_forward(x, weights, biases, act_fun=act_fun, use_bf16=True))
    assert jnp.allclose(out_bf16, ref, atol=1e-1, rtol=1e-1), "mismatch vs reference (bf16)"

    print("KERNEL_OK")
</pallas_src>

<mosaic_0001>
module attributes {stable_mosaic.version = 11 : i64} {
  func.func @kernel(%arg0: i32, %arg1: memref<1x256xf32, #tpu.memory_space<vmem>>, %arg2: memref<32x1024xf32, #tpu.memory_space<vmem>>, %arg3: memref<1x256xf32, #tpu.memory_space<vmem>>) attributes {dimension_semantics = [#tpu.dimension_semantics<parallel>], iteration_bounds = array<i64: 1>, scalar_prefetch = 0 : i64, scratch_operands = 0 : i64, tpu.core_type = #tpu.core_type<tc>, window_params = [{transform_indices = @transform_0, window_bounds = array<i64: 1, 256>}, {pipeline_mode = #tpu.pipeline_mode<synchronous>, transform_indices = @transform_1, window_bounds = array<i64: 32, 1024>}, {transform_indices = @transform_2, window_bounds = array<i64: 1, 256>}]} {
    %c0 = arith.constant 0 : index
    %c0_0 = arith.constant 0 : index
    %0 = vector.load %arg1[%c0, %c0_0] : memref<1x256xf32, #tpu.memory_space<vmem>>, vector<1x256xf32>
    %c0_1 = arith.constant 0 : index
    %c128 = arith.constant 128 : index
    %1 = vector.load %arg2[%c0_1, %c128] : memref<32x1024xf32, #tpu.memory_space<vmem>>, vector<32x1xf32>
    %c0_2 = arith.constant 0 : index
    %c0_3 = arith.constant 0 : index
    %2 = vector.load %arg2[%c0_2, %c0_3] : memref<32x1024xf32, #tpu.memory_space<vmem>>, vector<32x1xf32>
    %3 = vector.broadcast %2 : vector<32x1xf32> to vector<32x256xf32>
    %4 = vector.broadcast %0 : vector<1x256xf32> to vector<32x256xf32>
    %5 = arith.mulf %3, %4 : vector<32x256xf32>
    %6 = vector.broadcast %1 : vector<32x1xf32> to vector<32x256xf32>
    %7 = arith.addf %5, %6 : vector<32x256xf32>
    %8 = math.tanh %7 : vector<32x256xf32>
    %c0_4 = arith.constant 0 : index
    %c384 = arith.constant 384 : index
    %9 = vector.load %arg2[%c0_4, %c384] : memref<32x1024xf32, #tpu.memory_space<vmem>>, vector<32x1xf32>
    %c0_5 = arith.constant 0 : index
    %c256 = arith.constant 256 : index
    %10 = vector.load %arg2[%c0_5, %c256] : memref<32x1024xf32, #tpu.memory_space<vmem>>, vector<32x32xf32>
    %cst = arith.constant dense<0.000000e+00> : vector<32x256xf32>
    %11 = tpu.matmul %10, %8, %cst {dimension_numbers = #tpu.dot_dimension_numbers<[1], [0], [0], [1], [0, 0, 1, 1], [], []>} : vector<32x32xf32>, vector<32x256xf32>, vector<32x256xf32> -> vector<32x256xf32>
    %12 = vector.broadcast %9 : vector<32x1xf32> to vector<32x256xf32>
    %13 = arith.addf %11, %12 : vector<32x256xf32>
    %14 = math.tanh %13 : vector<32x256xf32>
    %c0_6 = arith.constant 0 : index
    %c640 = arith.constant 640 : index
    %15 = vector.load %arg2[%c0_6, %c640] : memref<32x1024xf32, #tpu.memory_space<vmem>>, vector<32x1xf32>
    %c0_7 = arith.constant 0 : index
    %c512 = arith.constant 512 : index
    %16 = vector.load %arg2[%c0_7, %c512] : memref<32x1024xf32, #tpu.memory_space<vmem>>, vector<32x32xf32>
    %cst_8 = arith.constant dense<0.000000e+00> : vector<32x256xf32>
    %17 = tpu.matmul %16, %14, %cst_8 {dimension_numbers = #tpu.dot_dimension_numbers<[1], [0], [0], [1], [0, 0, 1, 1], [], []>} : vector<32x32xf32>, vector<32x256xf32>, vector<32x256xf32> -> vector<32x256xf32>
    %18 = vector.broadcast %15 : vector<32x1xf32> to vector<32x256xf32>
    %19 = arith.addf %17, %18 : vector<32x256xf32>
    %20 = math.tanh %19 : vector<32x256xf32>
    %c0_9 = arith.constant 0 : index
    %c896 = arith.constant 896 : index
    %21 = vector.load %arg2[%c0_9, %c896] : memref<32x1024xf32, #tpu.memory_space<vmem>>, vector<1x1xf32>
    %c0_10 = arith.constant 0 : index
    %c768 = arith.constant 768 : index
    %22 = vector.load %arg2[%c0_10, %c768] : memref<32x1024xf32, #tpu.memory_space<vmem>>, vector<32x1xf32>
    %23 = vector.broadcast %22 : vector<32x1xf32> to vector<32x256xf32>
    %24 = arith.mulf %23, %20 : vector<32x256xf32>
    %cst_11 = arith.constant dense<0.000000e+00> : vector<256xf32>
    %25 = vector.multi_reduction <add>, %24, %cst_11 [0] : vector<32x256xf32> to vector<256xf32>
    %26 = vector.shape_cast %25 : vector<256xf32> to vector<1x256xf32>
    %27 = vector.broadcast %21 : vector<1x1xf32> to vector<1x256xf32>
    %28 = arith.addf %26, %27 : vector<1x256xf32>
    %c0_12 = arith.constant 0 : index
    %c0_13 = arith.constant 0 : index
    %29 = vector.load %arg3[%c0_12, %c0_13] : memref<1x256xf32, #tpu.memory_space<vmem>>, vector<1x256xf32>
    tpu.vector_store %arg3[%c0_12, %c0_13], %28 {strides = array<i32>} : memref<1x256xf32, #tpu.memory_space<vmem>>, vector<1x256xf32>,
    return
  }
  func.func @transform_0(%arg0: i32) -> (i32, i32) {
    %c0_i32 = arith.constant 0 : i32
    %c0_i32_0 = arith.constant 0 : i32
    return %c0_i32, %arg0 : i32, i32
  }
  func.func @transform_1(%arg0: i32) -> (i32, i32) {
    %c0_i32 = arith.constant 0 : i32
    %c0_i32_0 = arith.constant 0 : i32
    %c0_i32_1 = arith.constant 0 : i32
    return %c0_i32, %c0_i32_0 : i32, i32
  }
  func.func @transform_2(%arg0: i32) -> (i32, i32) {
    %c0_i32 = arith.constant 0 : i32
    %c0_i32_0 = arith.constant 0 : i32
    return %c0_i32, %arg0 : i32, i32
  }
}

</mosaic_0001>

<llo_original>
// kernel: net_forward.1
$region0: #{net_forward.1}
  #allocation0 [shape = 'u32[]', space=smem, size = 0x4, offset = 0x4, fixed_abs, tag = 'smem constant byte address 0x4 - core index']
  #allocation1 [shape = 'u32[144,128]{1,0:T(1,128)}', space=vmem, size = 0x12000, scoped, tag = 'internal scratch']
  %s0 = inlined_call_operand.vmem [shape: f32[1,256], index: 0, kind: input, shape index: {}]
  %s1 = inlined_call_operand.vmem [shape: f32[32,1024], index: 1, kind: input, shape index: {}]
  %s2 = inlined_call_operand.hbm [shape: f32[1,256], index: 2, kind: output, shape index: {}]
  %s3 = sld [smem:[#allocation0]]
  $region18: #{net_forward.1} parent=0
    _
  %s5 = ssub.s32 1, %s3
  %s6 = scalar_select 0, %s5, %s3
  $region1: #{net_forward.1} parent=0
    #allocation2 [shape = 'u8[1024]{0}', space=vmem, size = 0x400, scoped, tag = 'output window, operand 0, single buffered']
    #allocation3 [shape = 's32[1]{0}', space=sflag, size = 0x4, scoped, tag = 'scoped memory for net_forward.1']
    %7 = vsyncpa [#allocation3], 0
    // Predicated region
    $region2: #{net_forward.1} parent=1 // pred_check
      _
    $region3: #{net_forward.1} parent=1 // pred_check_branch
      %9 = sbr.rel (0) target = $region5
    $region4: #{net_forward.1} parent=1 // pred_region
      _
    $region5: #{net_forward.1} parent=1 // pred_fallthru
      _
    // Predicated region
    $region6: #{net_forward.1} parent=1 // pred_check
      _
    $region7: #{net_forward.1} parent=1 // pred_check_branch
      %11 = sbr.rel (0) target = $region9
    $region8: #{net_forward.1} parent=1 // pred_region
      _
    $region9: #{net_forward.1} parent=1 // pred_fallthru
      _
    %v12 = vld [vmem:[%s0] sm:$0x3]
    %v13 = vld [vmem:[%s1 + $0x8] sm:$0xff]
    %v14 = vld [vmem:[%s1 + $0x48] sm:$0xff]
    %v15 = vld [vmem:[%s1 + $0x88] sm:$0xff]
    %v16 = vld [vmem:[%s1 + $0xc8] sm:$0xff]
    %v17 = vld [vmem:[%s1] sm:$0xff]
    %v18 = vld [vmem:[%s1 + $0x40] sm:$0xff]
    %v19 = vld [vmem:[%s1 + $0x80] sm:$0xff]
    %v20 = vld [vmem:[%s1 + $0xc0] sm:$0xff]
    %22 = vset.pattern.permute.xlu0 0
    %23 = vperm.xlu0 %22, %v17
    %v24 = vpop.permute.xlu0 %23
    %27 = vset.pattern.permute.xlu0 0
    %28 = vperm.xlu0 %27, %v18
    %v29 = vpop.permute.xlu0 %28
    %32 = vset.pattern.permute.xlu0 0
    %33 = vperm.xlu0 %32, %v19
    %v34 = vpop.permute.xlu0 %33
    %37 = vset.pattern.permute.xlu0 0
    %38 = vperm.xlu0 %37, %v20
    %v39 = vpop.permute.xlu0 %38
    %v42 = vlaneseq
    %v43 = vshrl.u32 %v42, 7
    %v44 = vsub.s32 0, %v43
    %v45 = vrot.slane %v12, %v44
    %v46 = vlaneseq
    %v47 = vshrl.u32 %v46, 7
    %v48 = vsub.s32 1, %v47
    %v49 = vrot.slane %v12, %v48
    %v52 = vmul.f32 %v24, %v45
    %v53 = vmul.f32 %v24, %v49
    %v54 = vmul.f32 %v29, %v45
    %v55 = vmul.f32 %v29, %v49
    %v56 = vmul.f32 %v34, %v45
    %v57 = vmul.f32 %v34, %v49
    %v58 = vmul.f32 %v39, %v45
    %v59 = vmul.f32 %v39, %v49
    %61 = vset.pattern.permute.xlu0 0
    %62 = vperm.xlu0 %61, %v13
    %v63 = vpop.permute.xlu0 %62
    %66 = vset.pattern.permute.xlu0 0
    %67 = vperm.xlu0 %66, %v14
    %v68 = vpop.permute.xlu0 %67
    %71 = vset.pattern.permute.xlu0 0
    %72 = vperm.xlu0 %71, %v15
    %v73 = vpop.permute.xlu0 %72
    %76 = vset.pattern.permute.xlu0 0
    %77 = vperm.xlu0 %76, %v16
    %v78 = vpop.permute.xlu0 %77
    %v80 = vadd.f32 %v52, %v63
    %v81 = vadd.f32 %v53, %v63
    %v82 = vadd.f32 %v54, %v68
    %v83 = vadd.f32 %v55, %v68
    %v84 = vadd.f32 %v56, %v73
    %v85 = vadd.f32 %v57, %v73
    %v86 = vadd.f32 %v58, %v78
    %v87 = vadd.f32 %v59, %v78
    %v88 = vtanh.pop %v80
    %v89 = vtanh.pop %v81
    %v90 = vtanh.pop %v82
    %v91 = vtanh.pop %v83
    %v92 = vtanh.pop %v84
    %v93 = vtanh.pop %v85
    %v94 = vtanh.pop %v86
    %v95 = vtanh.pop %v87
    %v96 = vld [vmem:[%s1 + $0x18] sm:$0xff]
    %v97 = vld [vmem:[%s1 + $0x58] sm:$0xff]
    %v98 = vld [vmem:[%s1 + $0x98] sm:$0xff]
    %v99 = vld [vmem:[%s1 + $0xd8] sm:$0xff]
    %v100 = vld [vmem:[%s1 + $0x10] sm:$0xff]
    %v101 = vld [vmem:[%s1 + $0x50] sm:$0xff]
    %v102 = vld [vmem:[%s1 + $0x90] sm:$0xff]
    %v103 = vld [vmem:[%s1 + $0xd0] sm:$0xff]
    %105 = vset.pattern.permute.xlu0 0
    %106 = vperm.xlu0 %105, %v96
    %v107 = vpop.permute.xlu0 %106
    %110 = vset.pattern.permute.xlu0 0
    %111 = vperm.xlu0 %110, %v97
    %v112 = vpop.permute.xlu0 %111
    %115 = vset.pattern.permute.xlu0 0
    %116 = vperm.xlu0 %115, %v98
    %v117 = vpop.permute.xlu0 %116
    %120 = vset.pattern.permute.xlu0 0
    %121 = vperm.xlu0 %120, %v99
    %v122 = vpop.permute.xlu0 %121
    %vm124 = vcmask 261120
    %v126 = vsel %vm124, %v100, 0
    %v129 = vsel %vm124, %v101, 0
    %v132 = vsel %vm124, %v102, 0
    %v135 = vsel %vm124, %v103, 0
    %137 = vmatprep.subr.mxu0 0.0
    %138 = vmatpush1.msra.mxu0 0.0
    %139 = vmatprep.subr.mxu0 0.0
    %140 = vmatpush1.msra.mxu0 0.0
    %141 = vmatprep.subr.mxu0 0.0
    %142 = vmatpush1.msra.mxu0 0.0
    %143 = vmatprep.subr.mxu0 0.0
    %144 = vmatpush1.msra.mxu0 0.0
    %145 = vmatprep.subr.mxu0 0.0
    %146 = vmatpush1.msra.mxu0 0.0
    %147 = vmatprep.subr.mxu0 0.0
    %148 = vmatpush1.msra.mxu0 0.0
    %149 = vmatprep.subr.mxu0 0.0
    %150 = vmatpush1.msra.mxu0 0.0
    %151 = vmatprep.subr.mxu0 0.0
    %152 = vmatpush1.msra.mxu0 0.0
    %153 = vmatprep.subr.mxu0 0.0
    %154 = vmatpush1.msra.mxu0 0.0
    %155 = vmatprep.subr.mxu0 0.0
    %156 = vmatpush1.msra.mxu0 0.0
    %157 = vmatprep.subr.mxu0 0.0
    %158 = vmatpush1.msra.mxu0 0.0
    %159 = vmatprep.subr.mxu0 0.0
    %160 = vmatpush1.msra.mxu0 0.0
    %161 = vmatprep.subr.mxu0 %v95
    %162 = vmatpush1.msra.mxu0 %v94
    %163 = vmatprep.subr.mxu0 %v93
    %164 = vmatpush1.msra.mxu0 %v92
    %165 = vmatprep.subr.mxu0 %v91
    %166 = vmatpush1.msra.mxu0 %v90
    %167 = vmatprep.subr.mxu0 %v89
    %168 = vmatpush1.msra.mxu0 %v88
    %169 = vmatprep.subr.mxu0 0.0
    %170 = vmatpush2.msra.mxu0 0.0
    %171 = vmatprep.subr.mxu0 0.0
    %172 = vmatpush2.msra.mxu0 0.0
    %173 = vmatprep.subr.mxu0 0.0
    %174 = vmatpush2.msra.mxu0 0.0
    %175 = vmatprep.subr.mxu0 0.0
    %176 = vmatpush2.msra.mxu0 0.0
    %177 = vmatprep.subr.mxu0 0.0
    %178 = vmatpush2.msra.mxu0 0.0
    %179 = vmatprep.subr.mxu0 0.0
    %180 = vmatpush2.msra.mxu0 0.0
    %181 = vmatprep.subr.mxu0 0.0
    %182 = vmatpush2.msra.mxu0 0.0
    %183 = vmatprep.subr.mxu0 0.0
    %184 = vmatpush2.msra.mxu0 0.0
    %185 = vmatprep.subr.mxu0 0.0
    %186 = vmatpush2.msra.mxu0 0.0
    %187 = vmatprep.subr.mxu0 0.0
    %188 = vmatpush2.msra.mxu0 0.0
    %189 = vmatprep.subr.mxu0 0.0
    %190 = vmatpush2.msra.mxu0 0.0
    %191 = vmatprep.subr.mxu0 0.0
    %192 = vmatpush2.msra.mxu0 0.0
    %193 = vmatprep.subr.mxu0 0.0
    %194 = vmatpush2.msra.mxu0 0.0
    %195 = vmatprep.subr.mxu0 0.0
    %196 = vmatpush2.msra.mxu0 0.0
    %197 = vmatprep.subr.mxu0 0.0
    %198 = vmatpush2.msra.mxu0 0.0
    %199 = vmatprep.subr.mxu0 0.0
    %200 = vmatpush2.msra.mxu0 0.0
    %201 = vmatprep.mubr.f32.mxu0 0.0
    %202 = vmatmul.mubr.f32.gmra.mxu0 %v126
    %v203 = vpop.f32.mrf.mxu0
    %v204 = vadd.f32 %v107, %v203
    %v205 = vpop.f32.mrf.mxu0
    %v206 = vadd.f32 %v107, %v205
    %207 = vmatprep.mubr.f32.mxu0 0.0
    %208 = vmatmul.mubr.f32.gmra.mxu0 %v129
    %v209 = vpop.f32.mrf.mxu0
    %v210 = vadd.f32 %v112, %v209
    %v211 = vpop.f32.mrf.mxu0
    %v212 = vadd.f32 %v112, %v211
    %213 = vmatprep.mubr.f32.mxu0 0.0
    %214 = vmatmul.mubr.f32.gmra.mxu0 %v132
    %v215 = vpop.f32.mrf.mxu0
    %v216 = vadd.f32 %v117, %v215
    %v217 = vpop.f32.mrf.mxu0
    %v218 = vadd.f32 %v117, %v217
    %219 = vmatprep.mubr.f32.mxu0 0.0
    %220 = vmatmul.mubr.f32.gmra.mxu0 %v135
    %v221 = vpop.f32.mrf.mxu0
    %v222 = vadd.f32 %v122, %v221
    %v223 = vpop.f32.mrf.mxu0
    %v224 = vadd.f32 %v122, %v223
    %225 = vdwg.mxu0
    %v226 = vtanh.pop %v204
    %v227 = vtanh.pop %v206
    %v228 = vtanh.pop %v210
    %v229 = vtanh.pop %v212
    %v230 = vtanh.pop %v216
    %v231 = vtanh.pop %v218
    %v232 = vtanh.pop %v222
    %v233 = vtanh.pop %v224
    %v234 = vld [vmem:[%s1 + $0x28] sm:$0xff]
    %v235 = vld [vmem:[%s1 + $0x68] sm:$0xff]
    %v236 = vld [vmem:[%s1 + $0xa8] sm:$0xff]
    %v237 = vld [vmem:[%s1 + $0xe8] sm:$0xff]
    %v238 = vld [vmem:[%s1 + $0x20] sm:$0xff]
    %v239 = vld [vmem:[%s1 + $0x60] sm:$0xff]
    %v240 = vld [vmem:[%s1 + $0xa0] sm:$0xff]
    %v241 = vld [vmem:[%s1 + $0xe0] sm:$0xff]
    %243 = vset.pattern.permute.xlu0 0
    %244 = vperm.xlu0 %243, %v234
    %v245 = vpop.permute.xlu0 %244
    %248 = vset.pattern.permute.xlu0 0
    %249 = vperm.xlu0 %248, %v235
    %v250 = vpop.permute.xlu0 %249
    %253 = vset.pattern.permute.xlu0 0
    %254 = vperm.xlu0 %253, %v236
    %v255 = vpop.permute.xlu0 %254
    %258 = vset.pattern.permute.xlu0 0
    %259 = vperm.xlu0 %258, %v237
    %v260 = vpop.permute.xlu0 %259
    %v263 = vsel %vm124, %v238, 0
    %v266 = vsel %vm124, %v239, 0
    %v269 = vsel %vm124, %v240, 0
    %v272 = vsel %vm124, %v241, 0
    %274 = vmatprep.subr.mxu0 0.0
    %275 = vmatpush1.msra.mxu0 0.0
    %276 = vmatprep.subr.mxu0 0.0
    %277 = vmatpush1.msra.mxu0 0.0
    %278 = vmatprep.subr.mxu0 0.0
    %279 = vmatpush1.msra.mxu0 0.0
    %280 = vmatprep.subr.mxu0 0.0
    %281 = vmatpush1.msra.mxu0 0.0
    %282 = vmatprep.subr.mxu0 0.0
    %283 = vmatpush1.msra.mxu0 0.0
    %284 = vmatprep.subr.mxu0 0.0
    %285 = vmatpush1.msra.mxu0 0.0
    %286 = vmatprep.subr.mxu0 0.0
    %287 = vmatpush1.msra.mxu0 0.0
    %288 = vmatprep.subr.mxu0 0.0
    %289 = vmatpush1.msra.mxu0 0.0
    %290 = vmatprep.subr.mxu0 0.0
    %291 = vmatpush1.msra.mxu0 0.0
    %292 = vmatprep.subr.mxu0 0.0
    %293 = vmatpush1.msra.mxu0 0.0
    %294 = vmatprep.subr.mxu0 0.0
    %295 = vmatpush1.msra.mxu0 0.0
    %296 = vmatprep.subr.mxu0 0.0
    %297 = vmatpush1.msra.mxu0 0.0
    %298 = vmatprep.subr.mxu0 %v233
    %299 = vmatpush1.msra.mxu0 %v232
    %300 = vmatprep.subr.mxu0 %v231
    %301 = vmatpush1.msra.mxu0 %v230
    %302 = vmatprep.subr.mxu0 %v229
    %303 = vmatpush1.msra.mxu0 %v228
    %304 = vmatprep.subr.mxu0 %v227
    %305 = vmatpush1.msra.mxu0 %v226
    %306 = vmatprep.subr.mxu0 0.0
    %307 = vmatpush2.msra.mxu0 0.0
    %308 = vmatprep.subr.mxu0 0.0
    %309 = vmatpush2.msra.mxu0 0.0
    %310 = vmatprep.subr.mxu0 0.0
    %311 = vmatpush2.msra.mxu0 0.0
    %312 = vmatprep.subr.mxu0 0.0
    %313 = vmatpush2.msra.mxu0 0.0
    %314 = vmatprep.subr.mxu0 0.0
    %315 = vmatpush2.msra.mxu0 0.0
    %316 = vmatprep.subr.mxu0 0.0
    %317 = vmatpush2.msra.mxu0 0.0
    %318 = vmatprep.subr.mxu0 0.0
    %319 = vmatpush2.msra.mxu0 0.0
    %320 = vmatprep.subr.mxu0 0.0
    %321 = vmatpush2.msra.mxu0 0.0
    %322 = vmatprep.subr.mxu0 0.0
    %323 = vmatpush2.msra.mxu0 0.0
    %324 = vmatprep.subr.mxu0 0.0
    %325 = vmatpush2.msra.mxu0 0.0
    %326 = vmatprep.subr.mxu0 0.0
    %327 = vmatpush2.msra.mxu0 0.0
    %328 = vmatprep.subr.mxu0 0.0
    %329 = vmatpush2.msra.mxu0 0.0
    %330 = vmatprep.subr.mxu0 0.0
    %331 = vmatpush2.msra.mxu0 0.0
    %332 = vmatprep.subr.mxu0 0.0
    %333 = vmatpush2.msra.mxu0 0.0
    %334 = vmatprep.subr.mxu0 0.0
    %335 = vmatpush2.msra.mxu0 0.0
    %336 = vmatprep.subr.mxu0 0.0
    %337 = vmatpush2.msra.mxu0 0.0
    %338 = vmatprep.mubr.f32.mxu0 0.0
    %339 = vmatmul.mubr.f32.gmra.mxu0 %v263
    %v340 = vpop.f32.mrf.mxu0
    %v341 = vadd.f32 %v245, %v340
    %v342 = vpop.f32.mrf.mxu0
    %v343 = vadd.f32 %v245, %v342
    %344 = vmatprep.mubr.f32.mxu0 0.0
    %345 = vmatmul.mubr.f32.gmra.mxu0 %v266
    %v346 = vpop.f32.mrf.mxu0
    %v347 = vadd.f32 %v250, %v346
    %v348 = vpop.f32.mrf.mxu0
    %v349 = vadd.f32 %v250, %v348
    %350 = vmatprep.mubr.f32.mxu0 0.0
    %351 = vmatmul.mubr.f32.gmra.mxu0 %v269
    %v352 = vpop.f32.mrf.mxu0
    %v353 = vadd.f32 %v255, %v352
    %v354 = vpop.f32.mrf.mxu0
    %v355 = vadd.f32 %v255, %v354
    %356 = vmatprep.mubr.f32.mxu0 0.0
    %357 = vmatmul.mubr.f32.gmra.mxu0 %v272
    %v358 = vpop.f32.mrf.mxu0
    %v359 = vadd.f32 %v260, %v358
    %v360 = vpop.f32.mrf.mxu0
    %v361 = vadd.f32 %v260, %v360
    %362 = vdwg.mxu0
    %v363 = vtanh.pop %v341
    %v364 = vtanh.pop %v343
    %v365 = vtanh.pop %v347
    %v366 = vtanh.pop %v349
    %v367 = vtanh.pop %v353
    %v368 = vtanh.pop %v355
    %v369 = vtanh.pop %v359
    %v370 = vtanh.pop %v361
    %v371 = vld [vmem:[%s1 + $0x38] ss:$0 sm:$0xff]
    %v372 = vld [vmem:[%s1 + $0x30] sm:$0xff]
    %v373 = vld [vmem:[%s1 + $0x70] sm:$0xff]
    %v374 = vld [vmem:[%s1 + $0xb0] sm:$0xff]
    %v375 = vld [vmem:[%s1 + $0xf0] sm:$0xff]
    %377 = vset.pattern.permute.xlu0 0
    %378 = vperm.xlu0 %377, %v372
    %v379 = vpop.permute.xlu0 %378
    %382 = vset.pattern.permute.xlu0 0
    %383 = vperm.xlu0 %382, %v373
    %v384 = vpop.permute.xlu0 %383
    %387 = vset.pattern.permute.xlu0 0
    %388 = vperm.xlu0 %387, %v374
    %v389 = vpop.permute.xlu0 %388
    %392 = vset.pattern.permute.xlu0 0
    %393 = vperm.xlu0 %392, %v375
    %v394 = vpop.permute.xlu0 %393
    %v396 = vmul.f32 %v379, %v363
    %v397 = vmul.f32 %v379, %v364
    %v398 = vmul.f32 %v384, %v365
    %v399 = vmul.f32 %v384, %v366
    %v400 = vmul.f32 %v389, %v367
    %v401 = vmul.f32 %v389, %v368
    %v402 = vmul.f32 %v394, %v369
    %v403 = vmul.f32 %v394, %v370
    %v404 = vadd.f32 %v396, %v398
    %v405 = vadd.f32 %v404, %v400
    %v406 = vadd.f32 %v405, %v402
    %v407 = vrot.slane %v406, 4
    %v408 = vadd.f32 %v406, %v407
    %v409 = vrot.slane %v408, 2
    %v410 = vadd.f32 %v408, %v409
    %v411 = vrot.slane %v410, 1
    %v412 = vadd.f32 %v410, %v411
    %v413 = vadd.f32 %v397, %v399
    %v414 = vadd.f32 %v413, %v401
    %v415 = vadd.f32 %v414, %v403
    %v416 = vrot.slane %v415, 4
    %v417 = vadd.f32 %v415, %v416
    %v418 = vrot.slane %v417, 2
    %v419 = vadd.f32 %v417, %v418
    %v420 = vrot.slane %v419, 1
    %v421 = vadd.f32 %v419, %v420
    %423 = vset.pattern.permute.xlu0 0
    %424 = vperm.xlu0 %423, %v371
    %v425 = vpop.permute.xlu0 %424
    %v427 = vadd.f32 %v412, %v425
    %v428 = vadd.f32 %v421, %v425
    %v431 = vcombine.low %v427, %v428
    %v433 = vunpack.c.l.s4 1966171168
    %v434 = vunpack.c.0.s8 %v433
    %v435 = vlaneseq
    %v436 = vshrl.u32 %v435, 7
    %v437 = vsub.s32 %v434, %v436
    %v438 = vrot.slane %v431, %v437
    %v440 = vunpack.c.l.s4 1966171168
    %v441 = vunpack.c.0.s8 %v440
    %v442 = vlaneseq
    %v443 = vshrl.u32 %v442, 7
    %v444 = vsub.s32 %v441, %v443
    %v445 = vrot.slane %v438, %v444
    %v447 = vlaneseq
    %vm448 = vcmp.ge.s32.totalorder %v447, 0
    %vm449 = vcmp.lt.s32.totalorder %v447, 256
    %vm450 = vmand %vm448, %vm449
    %451 = vst.msk [vmem:[#allocation2] sm:$0x3] %vm450, %v445
    // Predicated region
    $region10: #{net_forward.1} parent=1 // pred_check
      _
    $region11: #{net_forward.1} parent=1 // pred_check_branch
      %453 = sbr.rel (0) target = $region13
    $region12: #{net_forward.1} parent=1 // pred_region
      %s455 = ssub.s32 32, 32
      %456 = vsyncadd [#allocation3], %s455
      %s458 = sshll.u32 [#allocation2], 4
      %s459 = int_to_ptr.vmem [resolvable:$true] %s458
      %461 = dma.vmem_to_hbm [thread:$0]  %s459, 32, %s2, [#allocation3]
    $region13: #{net_forward.1} parent=1 // pred_fallthru
      _
    // Predicated region
    $region14: #{net_forward.1} parent=1 // pred_check
      _
    $region15: #{net_forward.1} parent=1 // pred_check_branch
      %463 = sbr.rel (0) target = $region17
    $region16: #{net_forward.1} parent=1 // pred_region
      %464 = dma.done [#allocation3], 32
    $region17: #{net_forward.1} parent=1 // pred_fallthru
      _
    %465 = vsyncpa [#allocation3], 1

</llo_original>
